<compile_context>
chip_gen: v6e
topology: v6e:2x2x1
jax: 0.10.0
libtpu: 0.0.40
codegen_flags: <defaults>
</compile_context>

<pallas_src>
import functools
import math

import jax
import jax.numpy as jnp
from jax.experimental import pallas as pl
from jax.experimental.pallas import tpu as pltpu

F32 = jnp.float32
BF16 = jnp.bfloat16
BN_EPS = 1e-5


def _rup(x, m):
    return ((x + m - 1) // m) * m


# ----------------------------------------------------------------------------
# Pallas kernel: tiled matmul, bf16 operands, f32 accumulator, fused
# scale/shift (+ optional residual add) (+ optional ReLU) epilogue.
# ----------------------------------------------------------------------------
def _make_matmul_kernel(relu, has_res):
    def kernel(*refs):
        if has_res:
            a_ref, b_ref, sc_ref, sh_ref, res_ref, o_ref, acc_ref = refs
        else:
            a_ref, b_ref, sc_ref, sh_ref, o_ref, acc_ref = refs
            res_ref = None

        @pl.when(pl.program_id(2) == 0)
        def _():
            acc_ref[...] = jnp.zeros_like(acc_ref)

        acc_ref[...] += jnp.dot(a_ref[...], b_ref[...],
                                preferred_element_type=jnp.float32)

        @pl.when(pl.program_id(2) == pl.num_programs(2) - 1)
        def _():
            r = acc_ref[...] * sc_ref[...] + sh_ref[...]
            if res_ref is not None:
                r = r + res_ref[...]
            if relu:
                r = jnp.maximum(r, 0.0)
            o_ref[...] = r.astype(o_ref.dtype)

    return kernel


def _choose_tk(K):
    """K tile: multiple of 128, <=1024, minimizing padded K then step count."""
    kp = _rup(K, 128)
    if kp <= 1024:
        return kp, kp
    best = None
    nk0 = -(-K // 1024)
    for nk in range(nk0, nk0 + 9):
        tk = min(1024, _rup(-(-K // nk), 128))
        kpad = _rup(K, tk)
        cand = (kpad, kpad // tk, tk)
        if best is None or cand < best:
            best = cand
    kpad, _, tk = best
    return tk, kpad


def _matmul_fused(a, b, scale, shift, relu, residual=None):
    """(M,K)@(K,N) * scale[N] + shift[N] (+ residual) (+ReLU) -> (M,N) f32."""
    M, K = a.shape
    _, N = b.shape

    # Tiny-N outputs (the 1x1 classifier, N=2) are not worth a padded launch.
    if N < 16:
        out = jnp.dot(a.astype(BF16), b.astype(BF16),
                      preferred_element_type=jnp.float32)
        out = out * scale + shift
        if residual is not None:
            out = out + residual
        if relu:
            out = jnp.maximum(out, 0.0)
        return out

    # Adaptive tiles.
    if M >= 128:
        tm = 128
        Mp = _rup(M, tm)
    else:
        tm = _rup(M, 16)          # bf16 sublane-packing granularity
        Mp = tm
    Np = _rup(N, 128)
    tn = 256 if (Np % 256 == 0) else 128
    tn = min(tn, Np)
    tk, Kp = _choose_tk(K)

    a = a.astype(BF16)
    b = b.astype(BF16)
    if (Mp, Kp) != (M, K):
        a = jnp.pad(a, ((0, Mp - M), (0, Kp - K)))
    if (Kp, Np) != (K, N):
        b = jnp.pad(b, ((0, Kp - K), (0, Np - N)))
    sc = scale if Np == N else jnp.pad(scale, (0, Np - N))
    sh = shift if Np == N else jnp.pad(shift, (0, Np - N))
    sc = sc.reshape(1, Np).astype(F32)
    sh = sh.reshape(1, Np).astype(F32)

    inputs = [a, b, sc, sh]
    in_specs = [
        pl.BlockSpec((tm, tk), lambda i, j, k: (i, k)),
        pl.BlockSpec((tk, tn), lambda i, j, k: (k, j)),
        pl.BlockSpec((1, tn), lambda i, j, k: (0, j)),
        pl.BlockSpec((1, tn), lambda i, j, k: (0, j)),
    ]
    if residual is not None:
        res = residual.astype(F32)
        if (Mp, Np) != (M, N):
            res = jnp.pad(res, ((0, Mp - M), (0, Np - N)))
        inputs.append(res)
        in_specs.append(pl.BlockSpec((tm, tn), lambda i, j, k: (i, j)))

    out = pl.pallas_call(
        _make_matmul_kernel(relu, residual is not None),
        out_shape=jax.ShapeDtypeStruct((Mp, Np), jnp.float32),
        grid=(Mp // tm, Np // tn, Kp // tk),
        in_specs=in_specs,
        out_specs=pl.BlockSpec((tm, tn), lambda i, j, k: (i, j)),
        scratch_shapes=[pltpu.VMEM((tm, tn), jnp.float32)],
        compiler_params=pltpu.CompilerParams(
            dimension_semantics=("parallel", "parallel", "arbitrary"),
            vmem_limit_bytes=32 * 1024 * 1024),
    )(*inputs)
    if (Mp, Np) != (M, N):
        out = out[:M, :N]
    return out


# ----------------------------------------------------------------------------
# Conv2d = im2col (glue, jitted) + Pallas matmul (hot path)
# ----------------------------------------------------------------------------
@functools.partial(jax.jit, static_argnames=("stride", "pad", "relu"))
def _conv2d_impl(x, w, scale, shift, residual, *, stride, pad, relu):
    N, H, W, Cin = x.shape
    Kh, Kw, _, Cout = w.shape
    xp = x.astype(BF16)
    if pad > 0:
        xp = jnp.pad(xp, ((0, 0), (pad, pad), (pad, pad), (0, 0)))
    Ho = (H + 2 * pad - Kh) // stride + 1
    Wo = (W + 2 * pad - Kw) // stride + 1
    cols = []
    for kh in range(Kh):
        for kw in range(Kw):
            cols.append(xp[:, kh:kh + stride * Ho:stride,
                           kw:kw + stride * Wo:stride, :])
    a = jnp.concatenate(cols, axis=-1).reshape(N * Ho * Wo, Kh * Kw * Cin)
    b = w.reshape(Kh * Kw * Cin, Cout).astype(BF16)
    res2d = None if residual is None else residual.reshape(N * Ho * Wo, Cout)
    out = _matmul_fused(a, b, scale, shift, relu, residual=res2d)
    return out.reshape(N, Ho, Wo, Cout)


def conv2d(x, w, *, stride=1, pad=0, scale=None, shift=None, relu=False,
           residual=None):
    Cout = w.shape[-1]
    if scale is None:
        scale = jnp.ones((Cout,), F32)
    if shift is None:
        shift = jnp.zeros((Cout,), F32)
    return _conv2d_impl(x, w, scale, shift, residual,
                        stride=stride, pad=pad, relu=relu)


# ----------------------------------------------------------------------------
# Glue ops (plain JAX): maxpool, bilinear upsample (align_corners=True), BN
# ----------------------------------------------------------------------------
@jax.jit
def maxpool3x3s2(x):
    N, H, W, C = x.shape
    neg = jnp.finfo(F32).min
    xp = jnp.pad(x, ((0, 0), (1, 1), (1, 1), (0, 0)), constant_values=neg)
    Ho = (H + 2 - 3) // 2 + 1
    Wo = (W + 2 - 3) // 2 + 1
    out = None
    for kh in range(3):
        for kw in range(3):
            s = xp[:, kh:kh + 2 * Ho:2, kw:kw + 2 * Wo:2, :]
            out = s if out is None else jnp.maximum(out, s)
    return out


@functools.partial(jax.jit, static_argnames=("scale",))
def upsample_bilinear(x, scale):
    """nn.Upsample(scale_factor=scale, mode='bilinear', align_corners=True)."""
    def interp(x, n_in, n_out, axis):
        if n_out == 1 or n_in == 1:
            pos = jnp.zeros((n_out,), F32)
        else:
            pos = jnp.arange(n_out, dtype=F32) * ((n_in - 1) / (n_out - 1))
        i0 = jnp.clip(jnp.floor(pos).astype(jnp.int32), 0, n_in - 1)
        i1 = jnp.clip(i0 + 1, 0, n_in - 1)
        w1 = pos - i0.astype(F32)
        w0 = 1.0 - w1
        x0 = jnp.take(x, i0, axis=axis)
        x1 = jnp.take(x, i1, axis=axis)
        shp = [1] * x.ndim
        shp[axis] = n_out
        return x0 * w0.reshape(shp) + x1 * w1.reshape(shp)

    N, H, W, C = x.shape
    x = interp(x, H, H * scale, 1)
    x = interp(x, W, W * scale, 2)
    return x


def bn_ss(bn):
    s = bn["gamma"] / jnp.sqrt(bn["var"] + BN_EPS)
    sh = bn["beta"] - bn["mean"] * s
    return s, sh


def bn_apply(x, bn):
    s, sh = bn_ss(bn)
    return x * s + sh


# ----------------------------------------------------------------------------
# Parameter construction (deterministic)
# ----------------------------------------------------------------------------
class KeyGen:
    def __init__(self, seed=0):
        self.key = jax.random.PRNGKey(seed)

    def __call__(self):
        self.key, k = jax.random.split(self.key)
        return k


def conv_w(kg, k, cin, cout):
    std = math.sqrt(2.0 / (k * k * cin))
    return jax.random.normal(kg(), (k, k, cin, cout), F32) * std


def conv_b(kg, cout):
    return jax.random.normal(kg(), (cout,), F32) * 0.01


def bn_p(c):
    # eval-mode BatchNorm with PyTorch default init / running stats
    return {"gamma": jnp.ones((c,), F32), "beta": jnp.zeros((c,), F32),
            "mean": jnp.zeros((c,), F32), "var": jnp.ones((c,), F32)}


def make_resbl(kg, inc, midc, outc, stride=1, upscale=1, skip1=0, skip2=0):
    p = {"stride": stride, "upscale": upscale,
         "w1": conv_w(kg, 3, inc + skip1, midc), "bn1": bn_p(midc),
         "w2": conv_w(kg, 3, midc + skip2, outc), "bn2": bn_p(outc)}
    if inc != outc or stride > 1 or upscale > 1:
        p["wd"] = conv_w(kg, 1, inc, outc)
        p["bnd"] = bn_p(outc)
    return p


def make_encoder(kg):
    return {
        "conv1": conv_w(kg, 7, 3, 64), "bn1": bn_p(64),
        "res1_1": make_resbl(kg, 64, 64, 64),
        "res1_2": make_resbl(kg, 64, 64, 64),
        "res2_1": make_resbl(kg, 64, 128, 128, stride=2),
        "res2_2": make_resbl(kg, 128, 128, 128),
        "res3_1": make_resbl(kg, 128, 256, 256, stride=2),
        "res3_2": make_resbl(kg, 256, 256, 256),
        "res4_1": make_resbl(kg, 256, 512, 512, stride=2),
        "res4_2": make_resbl(kg, 512, 512, 512),
        "conv5_w": conv_w(kg, 3, 512, 1024), "conv5_b": conv_b(kg, 1024),
        "bn5": bn_p(1024),
        "conv6_w": conv_w(kg, 3, 1024, 1024), "conv6_b": conv_b(kg, 1024),
        "bn6": bn_p(1024),
    }


def make_decoder(kg, outc):
    return {
        "conv6_w": conv_w(kg, 3, 2048, 1024), "conv6_b": conv_b(kg, 1024),
        "bn6": bn_p(1024),
        "conv5_w": conv_w(kg, 3, 1024, 512), "conv5_b": conv_b(kg, 512),
        "bn5": bn_p(512),
        "res4_2": make_resbl(kg, 512, 512, 512, skip2=1024),
        "res4_1": make_resbl(kg, 512, 512, 256, upscale=2),
        "res3_2": make_resbl(kg, 256, 256, 256, skip2=512),
        "res3_1": make_resbl(kg, 256, 256, 128, upscale=2),
        "res2_2": make_resbl(kg, 128, 128, 128, skip1=256),
        "res2_1": make_resbl(kg, 128, 128, 64, upscale=2),
        "res1_2": make_resbl(kg, 64, 64, 64, skip2=128),
        "res1_1": make_resbl(kg, 64, 64, 64),
        "conv1_w": conv_w(kg, 7, 192, 64), "bn1": bn_p(64),
        "cls_w": conv_w(kg, 1, 64, outc), "cls_b": conv_b(kg, outc),
    }


def make_cscdnet_params(outc, seed=0):
    kg = KeyGen(seed)
    return {"enc1": make_encoder(kg), "enc2": make_encoder(kg),
            "dec": make_decoder(kg, outc)}


# ----------------------------------------------------------------------------
# Forward pass
# ----------------------------------------------------------------------------
def resbl(p, x, skip1=None, skip2=None):
    stride, upscale = p["stride"], p["upscale"]
    inp = jnp.concatenate([x, skip1], axis=-1) if skip1 is not None else x
    s1, sh1 = bn_ss(p["bn1"])
    r = conv2d(inp, p["w1"], stride=stride, pad=1, scale=s1, shift=sh1, relu=True)
    if skip2 is not None:
        r = jnp.concatenate([r, skip2], axis=-1)

    if upscale > 1:
        # Upsample sits between conv2 and bn2/add, so the epilogue can't fuse.
        r = conv2d(r, p["w2"], stride=1, pad=1)
        r = upsample_bilinear(r, upscale)
        r = bn_apply(r, p["bn2"])
        if "wd" in p:
            idn = conv2d(x, p["wd"], stride=stride, pad=0)
            idn = upsample_bilinear(idn, upscale)
            idn = bn_apply(idn, p["bnd"])
        else:
            idn = x
        return jax.nn.relu(r + idn)

    # Non-upsampling block: fuse bn2 + residual add + ReLU into conv2 epilogue.
    if "wd" in p:
        sd, shd = bn_ss(p["bnd"])
        idn = conv2d(x, p["wd"], stride=stride, pad=0, scale=sd, shift=shd)
    else:
        idn = x
    s2, sh2 = bn_ss(p["bn2"])
    return conv2d(r, p["w2"], stride=1, pad=1, scale=s2, shift=sh2,
                  relu=True, residual=idn)


def encoder_forward(p, x):
    s1, sh1 = bn_ss(p["bn1"])
    f1 = conv2d(x, p["conv1"], stride=2, pad=3, scale=s1, shift=sh1, relu=True)
    f2 = maxpool3x3s2(f1)
    f2 = resbl(p["res1_1"], f2)
    f2 = resbl(p["res1_2"], f2)
    f3 = resbl(p["res2_1"], f2)
    f3 = resbl(p["res2_2"], f3)
    f4 = resbl(p["res3_1"], f3)
    f4 = resbl(p["res3_2"], f4)
    f5 = resbl(p["res4_1"], f4)
    f5 = resbl(p["res4_2"], f5)
    s5, sh5 = bn_ss(p["bn5"])
    f6 = conv2d(f5, p["conv5_w"], stride=2, pad=1,
                scale=s5, shift=s5 * p["conv5_b"] + sh5, relu=True)
    s6, sh6 = bn_ss(p["bn6"])
    f6 = conv2d(f6, p["conv6_w"], stride=1, pad=1,
                scale=s6, shift=s6 * p["conv6_b"] + sh6, relu=True)
    return f1, f2, f3, f4, f5, f6


def cscdnet_forward(params, x1_nchw, x2_nchw):
    # NCHW (PyTorch) -> NHWC (kernel layout)
    x1 = jnp.transpose(x1_nchw, (0, 2, 3, 1)).astype(F32)
    x2 = jnp.transpose(x2_nchw, (0, 2, 3, 1)).astype(F32)

    f1_1, f2_1, f3_1, f4_1, f5_1, f6_1 = encoder_forward(params["enc1"], x1)
    f1_2, f2_2, f3_2, f4_2, f5_2, f6_2 = encoder_forward(params["enc2"], x2)

    d = params["dec"]
    enc_f6 = jnp.concatenate([f6_1, f6_2], axis=-1)
    s6, sh6 = bn_ss(d["bn6"])
    dec = conv2d(enc_f6, d["conv6_w"], stride=1, pad=1,
                 scale=s6, shift=s6 * d["conv6_b"] + sh6, relu=True)
    dec = conv2d(dec, d["conv5_w"], stride=1, pad=1, shift=d["conv5_b"])
    dec = upsample_bilinear(dec, 2)
    dec = jax.nn.relu(bn_apply(dec, d["bn5"]))

    skp = jnp.concatenate([f5_1, f5_2], axis=-1)
    dec = resbl(d["res4_2"], dec, skip2=skp)
    dec = resbl(d["res4_1"], dec)

    skp = jnp.concatenate([f4_1, f4_2], axis=-1)
    dec = resbl(d["res3_2"], dec, skip2=skp)
    dec = resbl(d["res3_1"], dec)

    skp = jnp.concatenate([f3_1, f3_2], axis=-1)
    dec = resbl(d["res2_2"], dec, skip1=skp)
    dec = resbl(d["res2_1"], dec)

    skp = jnp.concatenate([f2_1, f2_2], axis=-1)
    dec = resbl(d["res1_2"], dec, skip2=skp)
    dec = resbl(d["res1_1"], dec)

    dec = upsample_bilinear(dec, 2)
    dec = jnp.concatenate([dec, f1_1, f1_2], axis=-1)
    dec = conv2d(dec, d["conv1_w"], stride=1, pad=3)
    dec = upsample_bilinear(dec, 2)
    dec = jax.nn.relu(bn_apply(dec, d["bn1"]))
    out = conv2d(dec, d["cls_w"], stride=1, pad=0, shift=d["cls_b"])

    # NHWC -> NCHW to match the PyTorch module's output convention
    return jnp.transpose(out, (0, 3, 1, 2))


# ----------------------------------------------------------------------------
if __name__ == "__main__":
    OUTC = 2
    # Spatial size must be divisible by 64 for the encoder/decoder skip shapes
    # to line up (6 stride-2 stages + symmetric decoder), so use 64x64.
    N, H, W = 1, 64, 64

    key = jax.random.PRNGKey(0)
    k1, k2 = jax.random.split(key)
    x1 = jax.random.normal(k1, (N, 3, H, W), F32)
    x2 = jax.random.normal(k2, (N, 3, H, W), F32)

    params = make_cscdnet_params(OUTC, seed=0)

    out = cscdnet_forward(params, x1, x2)
    out = jax.block_until_ready(out)

    assert out.shape == (N, OUTC, H, W), out.shape
    assert bool(jnp.all(jnp.isfinite(out)))
    print("KERNEL_OK")
</pallas_src>

<mosaic_0001>
module attributes {stable_mosaic.version = 11 : i64} {
  func.func @kernel(%arg0: i32, %arg1: i32, %arg2: i32, %arg3: memref<128x256xbf16, #tpu.memory_space<vmem>>, %arg4: memref<256x128xbf16, #tpu.memory_space<vmem>>, %arg5: memref<1x128xf32, #tpu.memory_space<vmem>>, %arg6: memref<1x128xf32, #tpu.memory_space<vmem>>, %arg7: memref<128x128xf32, #tpu.memory_space<vmem>>, %arg8: memref<128x128xf32, #tpu.memory_space<vmem>>) attributes {dimension_semantics = [#tpu.dimension_semantics<parallel>, #tpu.dimension_semantics<parallel>, #tpu.dimension_semantics<arbitrary>], iteration_bounds = array<i64: 8, 1, 1>, scalar_prefetch = 0 : i64, scratch_operands = 1 : i64, tpu.core_type = #tpu.core_type<tc>, window_params = [{transform_indices = @transform_0, window_bounds = array<i64: 128, 256>}, {transform_indices = @transform_1, window_bounds = array<i64: 256, 128>}, {transform_indices = @transform_2, window_bounds = array<i64: 1, 128>}, {transform_indices = @transform_3, window_bounds = array<i64: 1, 128>}, {transform_indices = @transform_4, window_bounds = array<i64: 128, 128>}]} {
    %c0_i32 = arith.constant 0 : i32
    %0 = arith.cmpi eq, %arg2, %c0_i32 : i32
    %1 = arith.extui %0 : i1 to i32
    %c0_i32_0 = arith.constant 0 : i32
    %2 = arith.cmpi ne, %1, %c0_i32_0 : i32
    scf.if %2 {
      %cst_10 = arith.constant 0.000000e+00 : f32
      %12 = vector.broadcast %cst_10 : f32 to vector<128x128xf32>
      %c0_11 = arith.constant 0 : index
      %c0_12 = arith.constant 0 : index
      %13 = vector.load %arg8[%c0_11, %c0_12] : memref<128x128xf32, #tpu.memory_space<vmem>>, vector<128x128xf32>
      tpu.vector_store %arg8[%c0_11, %c0_12], %12 {strides = array<i32>} : memref<128x128xf32, #tpu.memory_space<vmem>>, vector<128x128xf32>,
    } else {
    }
    %c0 = arith.constant 0 : index
    %c0_1 = arith.constant 0 : index
    %3 = vector.load %arg8[%c0, %c0_1] : memref<128x128xf32, #tpu.memory_space<vmem>>, vector<128x128xf32>
    %c0_2 = arith.constant 0 : index
    %c0_3 = arith.constant 0 : index
    %4 = vector.load %arg3[%c0_2, %c0_3] : memref<128x256xbf16, #tpu.memory_space<vmem>>, vector<128x256xbf16>
    %c0_4 = arith.constant 0 : index
    %c0_5 = arith.constant 0 : index
    %5 = vector.load %arg4[%c0_4, %c0_5] : memref<256x128xbf16, #tpu.memory_space<vmem>>, vector<256x128xbf16>
    %cst = arith.constant dense<0.000000e+00> : vector<128x128xf32>
    %6 = tpu.matmul %4, %5, %cst {dimension_numbers = #tpu.dot_dimension_numbers<[1], [0], [0], [1], [0, 0, 1, 1], [], []>} : vector<128x256xbf16>, vector<256x128xbf16>, vector<128x128xf32> -> vector<128x128xf32>
    %7 = arith.addf %3, %6 : vector<128x128xf32>
    %c0_6 = arith.constant 0 : index
    %c0_7 = arith.constant 0 : index
    %8 = vector.load %arg8[%c0_6, %c0_7] : memref<128x128xf32, #tpu.memory_space<vmem>>, vector<128x128xf32>
    tpu.vector_store %arg8[%c0_6, %c0_7], %7 {strides = array<i32>} : memref<128x128xf32, #tpu.memory_space<vmem>>, vector<128x128xf32>,
    %c0_i32_8 = arith.constant 0 : i32
    %9 = arith.cmpi eq, %arg2, %c0_i32_8 : i32
    %10 = arith.extui %9 : i1 to i32
    %c0_i32_9 = arith.constant 0 : i32
    %11 = arith.cmpi ne, %10, %c0_i32_9 : i32
    scf.if %11 {
      %c0_10 = arith.constant 0 : index
      %c0_11 = arith.constant 0 : index
      %12 = vector.load %arg8[%c0_10, %c0_11] : memref<128x128xf32, #tpu.memory_space<vmem>>, vector<128x128xf32>
      %c0_12 = arith.constant 0 : index
      %c0_13 = arith.constant 0 : index
      %13 = vector.load %arg5[%c0_12, %c0_13] : memref<1x128xf32, #tpu.memory_space<vmem>>, vector<1x128xf32>
      %14 = vector.broadcast %13 : vector<1x128xf32> to vector<128x128xf32>
      %15 = arith.mulf %12, %14 : vector<128x128xf32>
      %c0_14 = arith.constant 0 : index
      %c0_15 = arith.constant 0 : index
      %16 = vector.load %arg6[%c0_14, %c0_15] : memref<1x128xf32, #tpu.memory_space<vmem>>, vector<1x128xf32>
      %17 = vector.broadcast %16 : vector<1x128xf32> to vector<128x128xf32>
      %18 = arith.addf %15, %17 : vector<128x128xf32>
      %cst_16 = arith.constant 0.000000e+00 : f32
      %19 = vector.broadcast %cst_16 : f32 to vector<128x128xf32>
      %20 = arith.maximumf %18, %19 : vector<128x128xf32>
      %c0_17 = arith.constant 0 : index
      %c0_18 = arith.constant 0 : index
      %21 = vector.load %arg7[%c0_17, %c0_18] : memref<128x128xf32, #tpu.memory_space<vmem>>, vector<128x128xf32>
      tpu.vector_store %arg7[%c0_17, %c0_18], %20 {strides = array<i32>} : memref<128x128xf32, #tpu.memory_space<vmem>>, vector<128x128xf32>,
    } else {
    }
    return
  }
  func.func @transform_0(%arg0: i32, %arg1: i32, %arg2: i32) -> (i32, i32) {
    %c0_i32 = arith.constant 0 : i32
    return %arg0, %arg2 : i32, i32
  }
  func.func @transform_1(%arg0: i32, %arg1: i32, %arg2: i32) -> (i32, i32) {
    %c0_i32 = arith.constant 0 : i32
    return %arg2, %arg1 : i32, i32
  }
  func.func @transform_2(%arg0: i32, %arg1: i32, %arg2: i32) -> (i32, i32) {
    %c0_i32 = arith.constant 0 : i32
    %c0_i32_0 = arith.constant 0 : i32
    return %c0_i32, %arg1 : i32, i32
  }
  func.func @transform_3(%arg0: i32, %arg1: i32, %arg2: i32) -> (i32, i32) {
    %c0_i32 = arith.constant 0 : i32
    %c0_i32_0 = arith.constant 0 : i32
    return %c0_i32, %arg1 : i32, i32
  }
  func.func @transform_4(%arg0: i32, %arg1: i32, %arg2: i32) -> (i32, i32) {
    %c0_i32 = arith.constant 0 : i32
    return %arg0, %arg1 : i32, i32
  }
}

</mosaic_0001>

<llo_original>
// kernel: _conv2d_impl.1
$region0: #{_conv2d_impl.1}
  #allocation0 [shape = 'u32[]', space=smem, size = 0x4, offset = 0x4, fixed_abs, tag = 'smem constant byte address 0x4 - core index']
  #allocation1 [shape = 'u32[144,128]{1,0:T(1,128)}', space=vmem, size = 0x12000, scoped, tag = 'internal scratch']
  #allocation2 [shape = 'f32[128,128]{1,0:T(8,128)}', space=vmem, size = 0x10000, scoped, tag = 'scratch operand']
  %s0 = inlined_call_operand.vmem [shape: bf16[1024,256], index: 0, kind: input, shape index: {}]
  %s1 = inlined_call_operand.vmem [shape: bf16[256,128], index: 1, kind: input, shape index: {}]
  %s2 = inlined_call_operand.vmem [shape: f32[1,128], index: 2, kind: input, shape index: {}]
  %s3 = inlined_call_operand.vmem [shape: f32[1,128], index: 3, kind: input, shape index: {}]
  %s4 = inlined_call_operand.hbm [shape: f32[1024,128], index: 4, kind: output, shape index: {}]
  %s5 = sld [smem:[#allocation0]]
  $region57: #{_conv2d_impl.1} parent=0
    _
  %s7 = ssub.s32 1, %s5
  %s8 = scalar_select 0, %s7, %s5
  $region1: #{_conv2d_impl.1} parent=0
    #allocation3 [shape = 'u8[131072]{0}', space=vmem, size = 0x20000, scoped, tag = 'output window, operand 0']
    #allocation4 [shape = 's32[2]{0}', space=sflag, size = 0x8, scoped, tag = 'scoped memory for _conv2d_impl.1']
    %9 = vsyncpa [#allocation4], 0
    %s10 = scalar_lea.sflag [#allocation4], 1
    %11 = vsyncpa %s10, 0
    loop: start=0, step=1, limit=10
    $region2: #{_conv2d_impl.1} parent=1 // loop_pre_header
      _
    $region3: #{_conv2d_impl.1} parent=1 // loop_header
      %s13 = sphi 0, %s17
      %p14 = scmp.ge.s32.totalorder %s13, 10
      %s20 = sphi 0, %s39
      %s21 = sphi 0, %s35
      %s22 = sphi 0, %s31
      %s23 = sphi 0, %s20
      %s24 = sphi 0, %s21
      %s25 = sphi 0, %s22
      %s26 = sphi 0, %s23
      %s27 = sphi 0, %s24
      %s28 = sphi 0, %s25
      %s44 = sphi 0, %s46
      %s47 = sphi 0, %s44
      %s48 = sphi 0, %s47
      %s64 = sphi 0, %s48
      %s72 = sphi 0, %s74
      %s75 = sphi 0, %s72
      %s76 = sphi 0, %s75
      %s92 = sphi 0, %s76
      %s98 = sphi 0, %s100
      %s101 = sphi 0, %s98
      %s102 = sphi 0, %s101
      %s118 = sphi 0, %s102
      %s124 = sphi 0, %s126
      %s127 = sphi 0, %s124
      %s128 = sphi 0, %s127
      %s144 = sphi 0, %s128
      %s152 = sphi 0, %s154
      %s155 = sphi 0, %s152
      %s156 = sphi 0, %s155
      %s172 = sphi 0, %s156
    $region4: #{_conv2d_impl.1} parent=1 // loop_header_branch
      %16 = sbr.rel (%p14) target = $region8
    $region5: #{_conv2d_impl.1} parent=1 // loop_body
      %s18 = ssub.s32 %s13, 1
      %s19 = ssub.s32 %s13, 2
      %s29 = sadd.s32 1, %s22
      %p30 = scmp.ge.s32.totalorder %s29, 1
      %s31 = scalar_select %p30, 0, %s29
      %s32 = sadd.s32 1, %s21
      %s33 = scalar_select %p30, %s32, %s21
      %p34 = scmp.ge.s32.totalorder %s33, 1
      %s35 = scalar_select %p34, 0, %s33
      %s36 = sadd.s32 1, %s20
      %s37 = scalar_select %p34, %s36, %s20
      %p38 = scmp.ge.s32.totalorder %s37, 8
      %s39 = scalar_select %p38, 0, %s37
      %s40 = ssub.s32 %s20, %s39
      %s41 = ssub.s32 %s22, %s31
      %s42 = sor.u32 %s40, %s41
      %p43 = scmp.eq.s32.totalorder %s42, 0
      %s45 = sadd.s32 %s44, 1
      %s46 = scalar_select %p43, %s44, %s45
      %p49 = pneg %p43
      %p50 = scmp.eq.s32.totalorder %s13, 7
      %p51 = por %p49, %p50
      %p52 = scmp.ne.s32.totalorder %s44, %s47
      %p53 = scmp.eq.s32.totalorder %s13, 0
      %p54 = por %p52, %p53
      %p55 = scmp.ne.s32.totalorder %s44, %s47
      %p56 = scmp.eq.s32.totalorder %s18, 7
      %p57 = por %p55, %p56
      %p58 = scmp.ne.s32.totalorder %s47, %s48
      %p59 = scmp.eq.s32.totalorder %s18, 0
      %p60 = por %p58, %p59
      %p61 = scmp.ne.s32.totalorder %s47, %s48
      %p62 = scmp.eq.s32.totalorder %s19, 7
      %p63 = por %p61, %p62
      %p65 = scmp.ne.s32.totalorder %s48, %s64
      %p66 = scmp.eq.s32.totalorder %s19, 0
      %p67 = por %p65, %p66
      %s68 = ssub.s32 %s22, %s31
      %s69 = ssub.s32 %s21, %s35
      %s70 = sor.u32 %s68, %s69
      %p71 = scmp.eq.s32.totalorder %s70, 0
      %s73 = sadd.s32 %s72, 1
      %s74 = scalar_select %p71, %s72, %s73
      %p77 = pneg %p71
      %p78 = scmp.eq.s32.totalorder %s13, 7
      %p79 = por %p77, %p78
      %p80 = scmp.ne.s32.totalorder %s72, %s75
      %p81 = scmp.eq.s32.totalorder %s13, 0
      %p82 = por %p80, %p81
      %p83 = scmp.ne.s32.totalorder %s72, %s75
      %p84 = scmp.eq.s32.totalorder %s18, 7
      %p85 = por %p83, %p84
      %p86 = scmp.ne.s32.totalorder %s75, %s76
      %p87 = scmp.eq.s32.totalorder %s18, 0
      %p88 = por %p86, %p87
      %p89 = scmp.ne.s32.totalorder %s75, %s76
      %p90 = scmp.eq.s32.totalorder %s19, 7
      %p91 = por %p89, %p90
      %p93 = scmp.ne.s32.totalorder %s76, %s92
      %p94 = scmp.eq.s32.totalorder %s19, 0
      %p95 = por %p93, %p94
      %s96 = ssub.s32 %s21, %s35
      %p97 = scmp.eq.s32.totalorder %s96, 0
      %s99 = sadd.s32 %s98, 1
      %s100 = scalar_select %p97, %s98, %s99
      %p103 = pneg %p97
      %p104 = scmp.eq.s32.totalorder %s13, 7
      %p105 = por %p103, %p104
      %p106 = scmp.ne.s32.totalorder %s98, %s101
      %p107 = scmp.eq.s32.totalorder %s13, 0
      %p108 = por %p106, %p107
      %p109 = scmp.ne.s32.totalorder %s98, %s101
      %p110 = scmp.eq.s32.totalorder %s18, 7
      %p111 = por %p109, %p110
      %p112 = scmp.ne.s32.totalorder %s101, %s102
      %p113 = scmp.eq.s32.totalorder %s18, 0
      %p114 = por %p112, %p113
      %p115 = scmp.ne.s32.totalorder %s101, %s102
      %p116 = scmp.eq.s32.totalorder %s19, 7
      %p117 = por %p115, %p116
      %p119 = scmp.ne.s32.totalorder %s102, %s118
      %p120 = scmp.eq.s32.totalorder %s19, 0
      %p121 = por %p119, %p120
      %s122 = ssub.s32 %s21, %s35
      %p123 = scmp.eq.s32.totalorder %s122, 0
      %s125 = sadd.s32 %s124, 1
      %s126 = scalar_select %p123, %s124, %s125
      %p129 = pneg %p123
      %p130 = scmp.eq.s32.totalorder %s13, 7
      %p131 = por %p129, %p130
      %p132 = scmp.ne.s32.totalorder %s124, %s127
      %p133 = scmp.eq.s32.totalorder %s13, 0
      %p134 = por %p132, %p133
      %p135 = scmp.ne.s32.totalorder %s124, %s127
      %p136 = scmp.eq.s32.totalorder %s18, 7
      %p137 = por %p135, %p136
      %p138 = scmp.ne.s32.totalorder %s127, %s128
      %p139 = scmp.eq.s32.totalorder %s18, 0
      %p140 = por %p138, %p139
      %p141 = scmp.ne.s32.totalorder %s127, %s128
      %p142 = scmp.eq.s32.totalorder %s19, 7
      %p143 = por %p141, %p142
      %p145 = scmp.ne.s32.totalorder %s128, %s144
      %p146 = scmp.eq.s32.totalorder %s19, 0
      %p147 = por %p145, %p146
      %s148 = ssub.s32 %s20, %s39
      %s149 = ssub.s32 %s21, %s35
      %s150 = sor.u32 %s148, %s149
      %p151 = scmp.eq.s32.totalorder %s150, 0
      %s153 = sadd.s32 %s152, 1
      %s154 = scalar_select %p151, %s152, %s153
      %p157 = pneg %p151
      %p158 = scmp.eq.s32.totalorder %s13, 7
      %p159 = por %p157, %p158
      %p160 = scmp.ne.s32.totalorder %s152, %s155
      %p161 = scmp.eq.s32.totalorder %s13, 0
      %p162 = por %p160, %p161
      %p163 = scmp.ne.s32.totalorder %s152, %s155
      %p164 = scmp.eq.s32.totalorder %s18, 7
      %p165 = por %p163, %p164
      %p166 = scmp.ne.s32.totalorder %s155, %s156
      %p167 = scmp.eq.s32.totalorder %s18, 0
      %p168 = por %p166, %p167
      %p169 = scmp.ne.s32.totalorder %s155, %s156
      %p170 = scmp.eq.s32.totalorder %s19, 7
      %p171 = por %p169, %p170
      %p173 = scmp.ne.s32.totalorder %s156, %s172
      %p174 = scmp.eq.s32.totalorder %s19, 0
      %p175 = por %p173, %p174
      %p176 = scmp.le.s32.totalorder 1, %s13
      %p177 = scmp.lt.s32.totalorder %s13, 9
      %p178 = pnand %p176, %p177
      %p179 = pneg %p178
      // Predicated region
      $region9: #{_conv2d_impl.1} parent=5 // pred_check
        _
      $region10: #{_conv2d_impl.1} parent=5 // pred_check_branch
        %181 = sbr.rel (%p178) target = $region12
      $region11: #{_conv2d_impl.1} parent=5 // pred_region
        %s182 = ssub.s32 %s13, 1
        // Predicated region
        $region13: #{_conv2d_impl.1} parent=11 // pred_check
          %p183 = pneg %p88
        $region14: #{_conv2d_impl.1} parent=11 // pred_check_branch
          %185 = sbr.rel (%p183) target = $region16
        $region15: #{_conv2d_impl.1} parent=11 // pred_region
          %s186 = smul.u32 32, %s25
          %p187 = scmp.lt.s32.totalorder %s186, 31
          %s188 = scalar_select %p187, %s186, 31
          %p189 = scmp.lt.s32.totalorder %s24, 0
          %s190 = scalar_select %p189, %s24, 0
          %s191 = sadd.s32 %s190, %s188
          %s192 = smul.addr %s191, 4
          %s193 = scalar_lea.vmem %s1, %s192
          %s194 = smul.u32 32, %s25
        $region16: #{_conv2d_impl.1} parent=11 // pred_fallthru
          _
        // Predicated region
        $region17: #{_conv2d_impl.1} parent=11 // pred_check
          %p195 = pneg %p114
        $region18: #{_conv2d_impl.1} parent=11 // pred_check_branch
          %197 = sbr.rel (%p195) target = $region20
        $region19: #{_conv2d_impl.1} parent=11 // pred_region
          %p198 = scmp.lt.s32.totalorder %s24, 0
          %s199 = scalar_select %p198, %s24, 0
          %s200 = scalar_lea.vmem %s2, %s199
        $region20: #{_conv2d_impl.1} parent=11 // pred_fallthru
          _
        // Predicated region
        $region21: #{_conv2d_impl.1} parent=11 // pred_check
          %p201 = pneg %p140
        $region22: #{_conv2d_impl.1} parent=11 // pred_check_branch
          %203 = sbr.rel (%p201) target = $region24
        $region23: #{_conv2d_impl.1} parent=11 // pred_region
          %p204 = scmp.lt.s32.totalorder %s24, 0
          %s205 = scalar_select %p204, %s24, 0
          %s206 = scalar_lea.vmem %s3, %s205
        $region24: #{_conv2d_impl.1} parent=11 // pred_fallthru
          _
      $region12: #{_conv2d_impl.1} parent=5 // pred_fallthru
        _
      %p207 = scmp.lt.s32.totalorder %s13, 8
      // Predicated region
      $region25: #{_conv2d_impl.1} parent=5 // pred_check
        %p208 = pneg %p207
      $region26: #{_conv2d_impl.1} parent=5 // pred_check_branch
        %210 = sbr.rel (%p208) target = $region28
      $region27: #{_conv2d_impl.1} parent=5 // pred_region
        // Predicated region
        $region29: #{_conv2d_impl.1} parent=27 // pred_check
          %p211 = pneg %p54
        $region30: #{_conv2d_impl.1} parent=27 // pred_check_branch
          %213 = sbr.rel (%p211) target = $region32
        $region31: #{_conv2d_impl.1} parent=27 // pred_region
          %s214 = smul.u32 16, %s20
          %s215 = smul.u32 2, %s22
          %p216 = scmp.lt.s32.totalorder %s214, 127
          %s217 = scalar_select %p216, %s214, 127
          %p218 = scmp.lt.s32.totalorder %s215, 1
          %s219 = scalar_select %p218, %s215, 1
          %s220 = smul.addr %s217, 2
          %s221 = sadd.s32 %s219, %s220
          %s222 = smul.addr %s221, 4
          %s223 = scalar_lea.vmem %s0, %s222
          %s224 = smul.u32 16, %s20
          %s225 = smul.u32 2, %s22
        $region32: #{_conv2d_impl.1} parent=27 // pred_fallthru
          _
      $region28: #{_conv2d_impl.1} parent=5 // pred_fallthru
        _
      %p226 = scmp.le.s32.totalorder 1, %s13
      %p227 = scmp.lt.s32.totalorder %s13, 9
      %p228 = pnand %p226, %p227
      %p229 = pneg %p228
      // Predicated region
      $region33: #{_conv2d_impl.1} parent=5 // pred_check
        _
      $region34: #{_conv2d_impl.1} parent=5 // pred_check_branch
        %231 = sbr.rel (%p228) target = $region36
      $region35: #{_conv2d_impl.1} parent=5 // pred_region
        %s232 = ssub.s32 %s13, 1
        %s233 = smul.u32 16, %s23
        %s234 = smul.u32 2, %s25
        %p235 = scmp.lt.s32.totalorder %s233, 127
        %s236 = scalar_select %p235, %s233, 127
        %p237 = scmp.lt.s32.totalorder %s234, 1
        %s238 = scalar_select %p237, %s234, 1
        %s239 = smul.addr %s236, 2
        %s240 = sadd.s32 %s238, %s239
        %s241 = smul.addr %s240, 4
        %s242 = scalar_lea.vmem %s0, %s241
        %p243 = pneg %p60
        %p244 = pneg %p57
        %s245 = smul.u32 32, %s25
        %p246 = scmp.lt.s32.totalorder %s245, 31
        %s247 = scalar_select %p246, %s245, 31
        %p248 = scmp.lt.s32.totalorder %s24, 0
        %s249 = scalar_select %p248, %s24, 0
        %s250 = sadd.s32 %s249, %s247
        %s251 = smul.addr %s250, 4
        %s252 = scalar_lea.vmem %s1, %s251
        %p253 = pneg %p88
        %p254 = pneg %p85
        %p255 = scmp.lt.s32.totalorder %s24, 0
        %s256 = scalar_select %p255, %s24, 0
        %s257 = scalar_lea.vmem %s2, %s256
        %p258 = pneg %p114
        %p259 = pneg %p111
        %p260 = scmp.lt.s32.totalorder %s24, 0
        %s261 = scalar_select %p260, %s24, 0
        %s262 = scalar_lea.vmem %s3, %s261
        %p263 = pneg %p140
        %p264 = pneg %p137
        %p265 = pneg %p168
        %p266 = pneg %p165
        %s267 = sand.u32 %s155, 1
        %s268 = scalar_lea.sflag [#allocation4], %s267
        %s269 = sand.u32 %s155, 1
        %s270 = smul.addr %s269, 128
        %s271 = scalar_lea.vmem [#allocation3], %s270
        %s272 = smul.u32 16, %s23
        %s273 = smul.u32 2, %s25
        %p274 = scmp.lt.s32.totalorder %s272, 127
        %s275 = scalar_select %p274, %s272, 127
        %p276 = scmp.lt.s32.totalorder %s273, 1
        %s277 = scalar_select %p276, %s273, 1
        %s278 = smul.addr %s275, 2
        %s279 = sadd.s32 %s277, %s278
        %s280 = smul.addr %s279, 4
        %s281 = scalar_lea.vmem %s0, %s280
        %s282 = smul.u32 16, %s23
        %s283 = smul.u32 2, %s25
        %s284 = smul.u32 32, %s25
        %p285 = scmp.lt.s32.totalorder %s284, 31
        %s286 = scalar_select %p285, %s284, 31
        %p287 = scmp.lt.s32.totalorder %s24, 0
        %s288 = scalar_select %p287, %s24, 0
        %s289 = sadd.s32 %s288, %s286
        %s290 = smul.addr %s289, 4
        %s291 = scalar_lea.vmem %s1, %s290
        %s292 = smul.u32 32, %s25
        %p293 = scmp.lt.s32.totalorder %s24, 0
        %s294 = scalar_select %p293, %s24, 0
        %s295 = scalar_lea.vmem %s2, %s294
        %p296 = scmp.lt.s32.totalorder %s24, 0
        %s297 = scalar_select %p296, %s24, 0
        %s298 = scalar_lea.vmem %s3, %s297
        %s299 = smul.u32 16, %s23
        %p301 = scmp.eq.s32.totalorder %s25, 0
        // Predicated region
        $region37: #{_conv2d_impl.1} parent=35 // pred_check
          %p302 = pneg %p301
        $region38: #{_conv2d_impl.1} parent=35 // pred_check_branch
          %304 = sbr.rel (%p302) target = $region40
        $region39: #{_conv2d_impl.1} parent=35 // pred_region
          %305 = vst [vmem:[#allocation2] sm:$0xff] 0.0
          %306 = vst [vmem:[#allocation2 + $0x8] sm:$0xff] 0.0
          %307 = vst [vmem:[#allocation2 + $0x10] sm:$0xff] 0.0
          %308 = vst [vmem:[#allocation2 + $0x18] sm:$0xff] 0.0
          %309 = vst [vmem:[#allocation2 + $0x20] sm:$0xff] 0.0
          %310 = vst [vmem:[#allocation2 + $0x28] sm:$0xff] 0.0
          %311 = vst [vmem:[#allocation2 + $0x30] sm:$0xff] 0.0
          %312 = vst [vmem:[#allocation2 + $0x38] sm:$0xff] 0.0
          %313 = vst [vmem:[#allocation2 + $0x40] sm:$0xff] 0.0
          %314 = vst [vmem:[#allocation2 + $0x48] sm:$0xff] 0.0
          %315 = vst [vmem:[#allocation2 + $0x50] sm:$0xff] 0.0
          %316 = vst [vmem:[#allocation2 + $0x58] sm:$0xff] 0.0
          %317 = vst [vmem:[#allocation2 + $0x60] sm:$0xff] 0.0
          %318 = vst [vmem:[#allocation2 + $0x68] sm:$0xff] 0.0
          %319 = vst [vmem:[#allocation2 + $0x70] sm:$0xff] 0.0
          %320 = vst [vmem:[#allocation2 + $0x78] sm:$0xff] 0.0
        $region40: #{_conv2d_impl.1} parent=35 // pred_fallthru
          _
        %v321 = vld [vmem:[#allocation2] sm:$0xff]
        %v322 = vld [vmem:[#allocation2 + $0x8] sm:$0xff]
        %v323 = vld [vmem:[#allocation2 + $0x10] sm:$0xff]
        %v324 = vld [vmem:[#allocation2 + $0x18] sm:$0xff]
        %v325 = vld [vmem:[#allocation2 + $0x20] sm:$0xff]
        %v326 = vld [vmem:[#allocation2 + $0x28] sm:$0xff]
        %v327 = vld [vmem:[#allocation2 + $0x30] sm:$0xff]
        %v328 = vld [vmem:[#allocation2 + $0x38] sm:$0xff]
        %v329 = vld [vmem:[#allocation2 + $0x40] sm:$0xff]
        %v330 = vld [vmem:[#allocation2 + $0x48] sm:$0xff]
        %v331 = vld [vmem:[#allocation2 + $0x50] sm:$0xff]
        %v332 = vld [vmem:[#allocation2 + $0x58] sm:$0xff]
        %v333 = vld [vmem:[#allocation2 + $0x60] sm:$0xff]
        %v334 = vld [vmem:[#allocation2 + $0x68] sm:$0xff]
        %v335 = vld [vmem:[#allocation2 + $0x70] sm:$0xff]
        %v336 = vld [vmem:[#allocation2 + $0x78] sm:$0xff]
        %v337 = vld [vmem:[%s281] sm:$0xff]
        %v338 = vld [vmem:[%s281 + $0x8] sm:$0xff]
        %v339 = vld [vmem:[%s281 + $0x10] sm:$0xff]
        %v340 = vld [vmem:[%s281 + $0x18] sm:$0xff]
        %v341 = vld [vmem:[%s281 + $0x20] sm:$0xff]
        %v342 = vld [vmem:[%s281 + $0x28] sm:$0xff]
        %v343 = vld [vmem:[%s281 + $0x30] sm:$0xff]
        %v344 = vld [vmem:[%s281 + $0x38] sm:$0xff]
        %v345 = vld [vmem:[%s281 + $0x40] sm:$0xff]
        %v346 = vld [vmem:[%s281 + $0x48] sm:$0xff]
        %v347 = vld [vmem:[%s281 + $0x50] sm:$0xff]
        %v348 = vld [vmem:[%s281 + $0x58] sm:$0xff]
        %v349 = vld [vmem:[%s281 + $0x60] sm:$0xff]
        %v350 = vld [vmem:[%s281 + $0x68] sm:$0xff]
        %v351 = vld [vmem:[%s281 + $0x70] sm:$0xff]
        %v352 = vld [vmem:[%s281 + $0x78] sm:$0xff]
        %v353 = vld [vmem:[%s291] sm:$0xf]
        %v354 = vld [vmem:[%s291 + $0x4] sm:$0xf]
        %v355 = vld [vmem:[%s291 + $0x8] sm:$0xf]
        %v356 = vld [vmem:[%s291 + $0xc] sm:$0xf]
        %v357 = vld [vmem:[%s291 + $0x10] sm:$0xf]
        %v358 = vld [vmem:[%s291 + $0x14] sm:$0xf]
        %v359 = vld [vmem:[%s291 + $0x18] sm:$0xf]
        %v360 = vld [vmem:[%s291 + $0x1c] sm:$0xf]
        %v361 = vld [vmem:[%s291 + $0x20] sm:$0xf]
        %v362 = vld [vmem:[%s291 + $0x24] sm:$0xf]
        %v363 = vld [vmem:[%s291 + $0x28] sm:$0xf]
        %v364 = vld [vmem:[%s291 + $0x2c] sm:$0xf]
        %v365 = vld [vmem:[%s291 + $0x30] sm:$0xf]
        %v366 = vld [vmem:[%s291 + $0x34] sm:$0xf]
        %v367 = vld [vmem:[%s291 + $0x38] sm:$0xf]
        %v368 = vld [vmem:[%s291 + $0x3c] sm:$0xf]
        %v369 = vld [vmem:[%s291 + $0x40] sm:$0xf]
        %v370 = vld [vmem:[%s291 + $0x44] sm:$0xf]
        %v371 = vld [vmem:[%s291 + $0x48] sm:$0xf]
        %v372 = vld [vmem:[%s291 + $0x4c] sm:$0xf]
        %v373 = vld [vmem:[%s291 + $0x50] sm:$0xf]
        %v374 = vld [vmem:[%s291 + $0x54] sm:$0xf]
        %v375 = vld [vmem:[%s291 + $0x58] sm:$0xf]
        %v376 = vld [vmem:[%s291 + $0x5c] sm:$0xf]
        %v377 = vld [vmem:[%s291 + $0x60] sm:$0xf]
        %v378 = vld [vmem:[%s291 + $0x64] sm:$0xf]
        %v379 = vld [vmem:[%s291 + $0x68] sm:$0xf]
        %v380 = vld [vmem:[%s291 + $0x6c] sm:$0xf]
        %v381 = vld [vmem:[%s291 + $0x70] sm:$0xf]
        %v382 = vld [vmem:[%s291 + $0x74] sm:$0xf]
        %v383 = vld [vmem:[%s291 + $0x78] sm:$0xf]
        %v384 = vld [vmem:[%s291 + $0x7c] sm:$0xf]
        %v401 = vunpack.c.l.b16 %v337
        %v402 = vunpack.c.h.b16 %v337
        %v403 = vunpack.c.l.b16 %v338
        %v404 = vunpack.c.h.b16 %v338
        %v405 = vunpack.c.l.b16 %v339
        %v406 = vunpack.c.h.b16 %v339
        %v407 = vunpack.c.l.b16 %v340
        %v408 = vunpack.c.h.b16 %v340
        %v409 = vunpack.c.l.b16 %v341
        %v410 = vunpack.c.h.b16 %v341
        %v411 = vunpack.c.l.b16 %v342
        %v412 = vunpack.c.h.b16 %v342
        %v413 = vunpack.c.l.b16 %v343
        %v414 = vunpack.c.h.b16 %v343
        %v415 = vunpack.c.l.b16 %v344
        %v416 = vunpack.c.h.b16 %v344
        %v417 = vunpack.c.l.b16 %v345
        %v418 = vunpack.c.h.b16 %v345
        %v419 = vunpack.c.l.b16 %v346
        %v420 = vunpack.c.h.b16 %v346
        %v421 = vunpack.c.l.b16 %v347
        %v422 = vunpack.c.h.b16 %v347
        %v423 = vunpack.c.l.b16 %v348
        %v424 = vunpack.c.h.b16 %v348
        %v425 = vunpack.c.l.b16 %v349
        %v426 = vunpack.c.h.b16 %v349
        %v427 = vunpack.c.l.b16 %v350
        %v428 = vunpack.c.h.b16 %v350
        %v429 = vunpack.c.l.b16 %v351
        %v430 = vunpack.c.h.b16 %v351
        %v431 = vunpack.c.l.b16 %v352
        %v432 = vunpack.c.h.b16 %v352
        %v433 = vpack.c.b16 %v403, %v401
        %v434 = vpack.c.b16 %v404, %v402
        %v435 = vpack.c.b16 %v407, %v405
        %v436 = vpack.c.b16 %v408, %v406
        %v437 = vpack.c.b16 %v411, %v409
        %v438 = vpack.c.b16 %v412, %v410
        %v439 = vpack.c.b16 %v415, %v413
        %v440 = vpack.c.b16 %v416, %v414
        %v441 = vpack.c.b16 %v419, %v417
        %v442 = vpack.c.b16 %v420, %v418
        %v443 = vpack.c.b16 %v423, %v421
        %v444 = vpack.c.b16 %v424, %v422
        %v445 = vpack.c.b16 %v427, %v425
        %v446 = vpack.c.b16 %v428, %v426
        %v447 = vpack.c.b16 %v431, %v429
        %v448 = vpack.c.b16 %v432, %v430
        %v497 = vunpack.c.l.b16 %v353
        %v498 = vunpack.c.l.b16 %v354
        %v499 = vunpack.c.l.b16 %v355
        %v500 = vunpack.c.l.b16 %v356
        %v501 = vunpack.c.l.b16 %v357
        %v502 = vunpack.c.l.b16 %v358
        %v503 = vunpack.c.l.b16 %v359
        %v504 = vunpack.c.l.b16 %v360
        %v505 = vunpack.c.l.b16 %v361
        %v506 = vunpack.c.l.b16 %v362
        %v507 = vunpack.c.l.b16 %v363
        %v508 = vunpack.c.l.b16 %v364
        %v509 = vunpack.c.l.b16 %v365
        %v510 = vunpack.c.l.b16 %v366
        %v511 = vunpack.c.l.b16 %v367
        %v512 = vunpack.c.l.b16 %v368
        %v513 = vunpack.c.l.b16 %v369
        %v514 = vunpack.c.l.b16 %v370
        %v515 = vunpack.c.l.b16 %v371
        %v516 = vunpack.c.l.b16 %v372
        %v517 = vunpack.c.l.b16 %v373
        %v518 = vunpack.c.l.b16 %v374
        %v519 = vunpack.c.l.b16 %v375
        %v520 = vunpack.c.l.b16 %v376
        %v521 = vunpack.c.l.b16 %v377
        %v522 = vunpack.c.l.b16 %v378
        %v523 = vunpack.c.l.b16 %v379
        %v524 = vunpack.c.l.b16 %v380
        %v525 = vunpack.c.l.b16 %v381
        %v526 = vunpack.c.l.b16 %v382
        %v527 = vunpack.c.l.b16 %v383
        %v528 = vunpack.c.l.b16 %v384
        %v529 = vpack.c.b16 %v498, %v497
        %v530 = vpack.c.b16 %v500, %v499
        %v531 = vpack.c.b16 %v502, %v501
        %v532 = vpack.c.b16 %v504, %v503
        %v533 = vpack.c.b16 %v506, %v505
        %v534 = vpack.c.b16 %v508, %v507
        %v535 = vpack.c.b16 %v510, %v509
        %v536 = vpack.c.b16 %v512, %v511
        %v537 = vpack.c.b16 %v514, %v513
        %v538 = vpack.c.b16 %v516, %v515
        %v539 = vpack.c.b16 %v518, %v517
        %v540 = vpack.c.b16 %v520, %v519
        %v541 = vpack.c.b16 %v522, %v521
        %v542 = vpack.c.b16 %v524, %v523
        %v543 = vpack.c.b16 %v526, %v525
        %v544 = vpack.c.b16 %v528, %v527
        %561 = vmatprep.subr.bf16.mxu0 0
        %562 = vmatpush1.bf16.msra.mxu0 %v536
        %563 = vmatprep.subr.bf16.mxu0 0
        %564 = vmatpush1.bf16.msra.mxu0 %v535
        %565 = vmatprep.subr.bf16.mxu0 0
        %566 = vmatpush1.bf16.msra.mxu0 %v534
        %567 = vmatprep.subr.bf16.mxu0 0
        %568 = vmatpush1.bf16.msra.mxu0 %v533
        %569 = vmatprep.subr.bf16.mxu0 0
        %570 = vmatpush1.bf16.msra.mxu0 %v532
        %571 = vmatprep.subr.bf16.mxu0 0
        %572 = vmatpush1.bf16.msra.mxu0 %v531
        %573 = vmatprep.subr.bf16.mxu0 0
        %574 = vmatpush1.bf16.msra.mxu0 %v530
        %575 = vmatprep.subr.bf16.mxu0 0
        %576 = vmatpush1.bf16.msra.mxu0 %v529
        %577 = vmatprep.subr.bf16.mxu0 0
        %578 = vmatpush2.bf16.msra.mxu0 %v544
        %579 = vmatprep.subr.bf16.mxu0 0
        %580 = vmatpush2.bf16.msra.mxu0 %v543
        %581 = vmatprep.subr.bf16.mxu0 0
        %582 = vmatpush2.bf16.msra.mxu0 %v542
        %583 = vmatprep.subr.bf16.mxu0 0
        %584 = vmatpush2.bf16.msra.mxu0 %v541
        %585 = vmatprep.subr.bf16.mxu0 0
        %586 = vmatpush2.bf16.msra.mxu0 %v540
        %587 = vmatprep.subr.bf16.mxu0 0
        %588 = vmatpush2.bf16.msra.mxu0 %v539
        %589 = vmatprep.subr.bf16.mxu0 0
        %590 = vmatpush2.bf16.msra.mxu0 %v538
        %591 = vmatprep.subr.bf16.mxu0 0
        %592 = vmatpush2.bf16.msra.mxu0 %v537
        %593 = vmatprep.mubr.bf16.mxu0 %v434
        %594 = vmatmul.mubr.bf16.gmra.mxu0 %v433
        %v595 = vpop.f32.mrf.mxu0
        %v596 = vadd.f32 0.0, %v595
        %v597 = vpop.f32.mrf.mxu0
        %v598 = vpop.f32.mrf.mxu0
        %v599 = vadd.f32 0.0, %v598
        %v600 = vpop.f32.mrf.mxu0
        %601 = vmatprep.mubr.bf16.mxu0 %v436
        %602 = vmatmul.mubr.bf16.gmra.mxu0 %v435
        %v603 = vpop.f32.mrf.mxu0
        %v604 = vadd.f32 0.0, %v603
        %v605 = vpop.f32.mrf.mxu0
        %v606 = vpop.f32.mrf.mxu0
        %v607 = vadd.f32 0.0, %v606
        %v608 = vpop.f32.mrf.mxu0
        %609 = vmatprep.mubr.bf16.mxu0 %v438
        %610 = vmatmul.mubr.bf16.gmra.mxu0 %v437
        %v611 = vpop.f32.mrf.mxu0
        %v612 = vadd.f32 0.0, %v611
        %v613 = vpop.f32.mrf.mxu0
        %v614 = vpop.f32.mrf.mxu0
        %v615 = vadd.f32 0.0, %v614
        %v616 = vpop.f32.mrf.mxu0
        %617 = vmatprep.mubr.bf16.mxu0 %v440
        %618 = vmatmul.mubr.bf16.gmra.mxu0 %v439
        %v619 = vpop.f32.mrf.mxu0
        %v620 = vadd.f32 0.0, %v619
        %v621 = vpop.f32.mrf.mxu0
        %v622 = vpop.f32.mrf.mxu0
        %v623 = vadd.f32 0.0, %v622
        %v624 = vpop.f32.mrf.mxu0
        %625 = vmatprep.mubr.bf16.mxu0 %v442
        %626 = vmatmul.mubr.bf16.gmra.mxu0 %v441
        %v627 = vpop.f32.mrf.mxu0
        %v628 = vadd.f32 0.0, %v627
        %v629 = vpop.f32.mrf.mxu0
        %v630 = vpop.f32.mrf.mxu0
        %v631 = vadd.f32 0.0, %v630
        %v632 = vpop.f32.mrf.mxu0
        %633 = vmatprep.mubr.bf16.mxu0 %v444
        %634 = vmatmul.mubr.bf16.gmra.mxu0 %v443
        %v635 = vpop.f32.mrf.mxu0
        %v636 = vadd.f32 0.0, %v635
        %v637 = vpop.f32.mrf.mxu0
        %v638 = vpop.f32.mrf.mxu0
        %v639 = vadd.f32 0.0, %v638
        %v640 = vpop.f32.mrf.mxu0
        %641 = vmatprep.mubr.bf16.mxu0 %v446
        %642 = vmatmul.mubr.bf16.gmra.mxu0 %v445
        %v643 = vpop.f32.mrf.mxu0
        %v644 = vadd.f32 0.0, %v643
        %v645 = vpop.f32.mrf.mxu0
        %v646 = vpop.f32.mrf.mxu0
        %v647 = vadd.f32 0.0, %v646
        %v648 = vpop.f32.mrf.mxu0
        %649 = vmatprep.mubr.bf16.mxu0 %v448
        %650 = vmatmul.mubr.bf16.gmra.mxu0 %v447
        %v651 = vpop.f32.mrf.mxu0
        %v652 = vadd.f32 0.0, %v651
        %v653 = vpop.f32.mrf.mxu0
        %v654 = vpop.f32.mrf.mxu0
        %v655 = vadd.f32 0.0, %v654
        %v656 = vpop.f32.mrf.mxu0
        %657 = vdwg.mxu0
        %v658 = vadd.f32 %v321, %v596
        %v659 = vadd.f32 %v322, %v599
        %v660 = vadd.f32 %v323, %v604
        %v661 = vadd.f32 %v324, %v607
        %v662 = vadd.f32 %v325, %v612
        %v663 = vadd.f32 %v326, %v615
        %v664 = vadd.f32 %v327, %v620
        %v665 = vadd.f32 %v328, %v623
        %v666 = vadd.f32 %v329, %v628
        %v667 = vadd.f32 %v330, %v631
        %v668 = vadd.f32 %v331, %v636
        %v669 = vadd.f32 %v332, %v639
        %v670 = vadd.f32 %v333, %v644
        %v671 = vadd.f32 %v334, %v647
        %v672 = vadd.f32 %v335, %v652
        %v673 = vadd.f32 %v336, %v655
        %674 = vst [vmem:[#allocation2] sm:$0xff] %v658
        %675 = vst [vmem:[#allocation2 + $0x8] sm:$0xff] %v659
        %676 = vst [vmem:[#allocation2 + $0x10] sm:$0xff] %v660
        %677 = vst [vmem:[#allocation2 + $0x18] sm:$0xff] %v661
        %678 = vst [vmem:[#allocation2 + $0x20] sm:$0xff] %v662
        %679 = vst [vmem:[#allocation2 + $0x28] sm:$0xff] %v663
        %680 = vst [vmem:[#allocation2 + $0x30] sm:$0xff] %v664
        %681 = vst [vmem:[#allocation2 + $0x38] sm:$0xff] %v665
        %682 = vst [vmem:[#allocation2 + $0x40] sm:$0xff] %v666
        %683 = vst [vmem:[#allocation2 + $0x48] sm:$0xff] %v667
        %684 = vst [vmem:[#allocation2 + $0x50] sm:$0xff] %v668
        %685 = vst [vmem:[#allocation2 + $0x58] sm:$0xff] %v669
        %686 = vst [vmem:[#allocation2 + $0x60] sm:$0xff] %v670
        %687 = vst [vmem:[#allocation2 + $0x68] sm:$0xff] %v671
        %688 = vst [vmem:[#allocation2 + $0x70] sm:$0xff] %v672
        %689 = vst [vmem:[#allocation2 + $0x78] sm:$0xff] %v673
        // Predicated region
        $region41: #{_conv2d_impl.1} parent=35 // pred_check
          %p690 = pneg %p301
        $region42: #{_conv2d_impl.1} parent=35 // pred_check_branch
          %692 = sbr.rel (%p690) target = $region44
        $region43: #{_conv2d_impl.1} parent=35 // pred_region
          %v693 = vld [vmem:[#allocation2] sm:$0xff]
          %v694 = vld [vmem:[#allocation2 + $0x8] sm:$0xff]
          %v695 = vld [vmem:[#allocation2 + $0x10] sm:$0xff]
          %v696 = vld [vmem:[#allocation2 + $0x18] sm:$0xff]
          %v697 = vld [vmem:[#allocation2 + $0x20] sm:$0xff]
          %v698 = vld [vmem:[#allocation2 + $0x28] sm:$0xff]
          %v699 = vld [vmem:[#allocation2 + $0x30] sm:$0xff]
          %v700 = vld [vmem:[#allocation2 + $0x38] sm:$0xff]
          %v701 = vld [vmem:[#allocation2 + $0x40] sm:$0xff]
          %v702 = vld [vmem:[#allocation2 + $0x48] sm:$0xff]
          %v703 = vld [vmem:[#allocation2 + $0x50] sm:$0xff]
          %v704 = vld [vmem:[#allocation2 + $0x58] sm:$0xff]
          %v705 = vld [vmem:[#allocation2 + $0x60] sm:$0xff]
          %v706 = vld [vmem:[#allocation2 + $0x68] sm:$0xff]
          %v707 = vld [vmem:[#allocation2 + $0x70] sm:$0xff]
          %v708 = vld [vmem:[#allocation2 + $0x78] sm:$0xff]
          %v709 = vld [vmem:[%s295] sm:$0x1]
          %v711 = vlaneseq
          %v712 = vshrl.u32 %v711, 7
          %v713 = vsub.s32 0, %v712
          %v714 = vrot.slane %v709, %v713
          %v716 = vmul.f32 %v693, %v714
          %v717 = vmul.f32 %v694, %v714
          %v718 = vmul.f32 %v695, %v714
          %v719 = vmul.f32 %v696, %v714
          %v720 = vmul.f32 %v697, %v714
          %v721 = vmul.f32 %v698, %v714
          %v722 = vmul.f32 %v699, %v714
          %v723 = vmul.f32 %v700, %v714
          %v724 = vmul.f32 %v701, %v714
          %v725 = vmul.f32 %v702, %v714
          %v726 = vmul.f32 %v703, %v714
          %v727 = vmul.f32 %v704, %v714
          %v728 = vmul.f32 %v705, %v714
          %v729 = vmul.f32 %v706, %v714
          %v730 = vmul.f32 %v707, %v714
          %v731 = vmul.f32 %v708, %v714
          %v732 = vld [vmem:[%s298] sm:$0x1]
          %v734 = vlaneseq
          %v735 = vshrl.u32 %v734, 7
          %v736 = vsub.s32 0, %v735
          %v737 = vrot.slane %v732, %v736
          %v739 = vadd.f32 %v716, %v737
          %v740 = vadd.f32 %v717, %v737
          %v741 = vadd.f32 %v718, %v737
          %v742 = vadd.f32 %v719, %v737
          %v743 = vadd.f32 %v720, %v737
          %v744 = vadd.f32 %v721, %v737
          %v745 = vadd.f32 %v722, %v737
          %v746 = vadd.f32 %v723, %v737
          %v747 = vadd.f32 %v724, %v737
          %v748 = vadd.f32 %v725, %v737
          %v749 = vadd.f32 %v726, %v737
          %v750 = vadd.f32 %v727, %v737
          %v751 = vadd.f32 %v728, %v737
          %v752 = vadd.f32 %v729, %v737
          %v753 = vadd.f32 %v730, %v737
          %v754 = vadd.f32 %v731, %v737
          %v755 = vmax.f32 %v739, 0.0
          %v756 = vmax.f32 %v740, 0.0
          %v757 = vmax.f32 %v741, 0.0
          %v758 = vmax.f32 %v742, 0.0
          %v759 = vmax.f32 %v743, 0.0
          %v760 = vmax.f32 %v744, 0.0
          %v761 = vmax.f32 %v745, 0.0
          %v762 = vmax.f32 %v746, 0.0
          %v763 = vmax.f32 %v747, 0.0
          %v764 = vmax.f32 %v748, 0.0
          %v765 = vmax.f32 %v749, 0.0
          %v766 = vmax.f32 %v750, 0.0
          %v767 = vmax.f32 %v751, 0.0
          %v768 = vmax.f32 %v752, 0.0
          %v769 = vmax.f32 %v753, 0.0
          %v770 = vmax.f32 %v754, 0.0
          %771 = vst [vmem:[%s271] sm:$0xff] %v755
          %772 = vst [vmem:[%s271 + $0x8] sm:$0xff] %v756
          %773 = vst [vmem:[%s271 + $0x10] sm:$0xff] %v757
          %774 = vst [vmem:[%s271 + $0x18] sm:$0xff] %v758
          %775 = vst [vmem:[%s271 + $0x20] sm:$0xff] %v759
          %776 = vst [vmem:[%s271 + $0x28] sm:$0xff] %v760
          %777 = vst [vmem:[%s271 + $0x30] sm:$0xff] %v761
          %778 = vst [vmem:[%s271 + $0x38] sm:$0xff] %v762
          %779 = vst [vmem:[%s271 + $0x40] sm:$0xff] %v763
          %780 = vst [vmem:[%s271 + $0x48] sm:$0xff] %v764
          %781 = vst [vmem:[%s271 + $0x50] sm:$0xff] %v765
          %782 = vst [vmem:[%s271 + $0x58] sm:$0xff] %v766
          %783 = vst [vmem:[%s271 + $0x60] sm:$0xff] %v767
          %784 = vst [vmem:[%s271 + $0x68] sm:$0xff] %v768
          %785 = vst [vmem:[%s271 + $0x70] sm:$0xff] %v769
          %786 = vst [vmem:[%s271 + $0x78] sm:$0xff] %v770
        $region44: #{_conv2d_impl.1} parent=35 // pred_fallthru
          _
        %s787 = sand.u32 %s155, 1
        %s788 = scalar_lea.sflag [#allocation4], %s787
        %s789 = sand.u32 %s155, 1
        %s790 = smul.addr %s789, 128
        %s791 = scalar_lea.vmem [#allocation3], %s790
        // Predicated region
        $region45: #{_conv2d_impl.1} parent=35 // pred_check
          %p792 = pneg %p165
        $region46: #{_conv2d_impl.1} parent=35 // pred_check_branch
          %794 = sbr.rel (%p792) target = $region48
        $region47: #{_conv2d_impl.1} parent=35 // pred_region
          %s795 = smul.u32 16, %s23
          %s797 = ssub.s32 2048, 2048
          %798 = vsyncadd %s788, %s797
          %s799 = sadd.s32 %s24, %s795
          %s800 = smul.addr %s799, 128
          %s801 = scalar_lea.hbm %s4, %s800
          %s802 = sshll.u32 %s791, 4
          %s803 = int_to_ptr.vmem [resolvable:$true] %s802
          %808 = dma.vmem_to_hbm [thread:$0]  %s803, 2048, %s801, %s788, 128, 128, 8
        $region48: #{_conv2d_impl.1} parent=35 // pred_fallthru
          _
      $region36: #{_conv2d_impl.1} parent=5 // pred_fallthru
        _
      %p809 = scmp.le.s32.totalorder 2, %s13
      // Predicated region
      $region49: #{_conv2d_impl.1} parent=5 // pred_check
        %p810 = pneg %p809
      $region50: #{_conv2d_impl.1} parent=5 // pred_check_branch
        %812 = sbr.rel (%p810) target = $region52
      $region51: #{_conv2d_impl.1} parent=5 // pred_region
        %s813 = ssub.s32 %s13, 2
        // Predicated region
        $region53: #{_conv2d_impl.1} parent=51 // pred_check
          %p814 = pneg %p171
        $region54: #{_conv2d_impl.1} parent=51 // pred_check_branch
          %816 = sbr.rel (%p814) target = $region56
        $region55: #{_conv2d_impl.1} parent=51 // pred_region
          %s817 = sand.u32 %s156, 1
          %s818 = scalar_lea.sflag [#allocation4], %s817
          %s819 = sand.u32 %s156, 1
          %s820 = smul.addr %s819, 128
          %s821 = scalar_lea.vmem [#allocation3], %s820
          %822 = dma.done %s818, 2048
        $region56: #{_conv2d_impl.1} parent=51 // pred_fallthru
          _
      $region52: #{_conv2d_impl.1} parent=5 // pred_fallthru
        _
    $region6: #{_conv2d_impl.1} parent=1 // loop_footer
      %s17 = sadd.s32 1, %s13
    $region7: #{_conv2d_impl.1} parent=1 // loop_footer_branch
      %12 = sbr.rel target = $region3
    $region8: #{_conv2d_impl.1} parent=1 // loop_exit
      _
    %823 = vsyncpa [#allocation4], 1
    %s824 = scalar_lea.sflag [#allocation4], 1
    %825 = vsyncpa %s824, 1

</llo_original>
